<compile_context>
chip_gen: v6e
topology: v6e:2x2x1
jax: 0.10.0
libtpu: 0.0.40
codegen_flags: <defaults>
</compile_context>

<pallas_src>
import math

import jax
import jax.numpy as jnp
from jax.experimental import pallas as pl
from jax.experimental.pallas import tpu as pltpu

_ADJ_QSCALE = 127.0  # A_hat entries are in [0, 1]


def _round_up(x, m):
    return ((x + m - 1) // m) * m


def _lcm(a, b):
    return a * b // math.gcd(a, b)


# ---------------------------------------------------------------------------
# Kernels
# ---------------------------------------------------------------------------

def _transform_kernel(x_ref, w_ref, o_ref, acc_ref):
    """o = X @ W, K-tiled over the feature dim. f32 accumulate, bf16 store."""
    k = pl.program_id(1)

    @pl.when(k == 0)
    def _():
        acc_ref[...] = jnp.zeros_like(acc_ref)

    acc_ref[...] += jnp.dot(x_ref[...], w_ref[...],
                            preferred_element_type=jnp.float32)

    @pl.when(k == pl.num_programs(1) - 1)
    def _():
        o_ref[...] = acc_ref[...].astype(o_ref.dtype)


def _agg_relu_transform_kernel(a_ref, xw_ref, b_ref, wn_ref, o_ref, acc_ref):
    """o = relu(A @ XW + b) @ W_next, K-tiled over nodes.

    a_ref is int8 (quantized A_hat; the 1/127 dequant is already folded into the
    weights that produced xw_ref) or bf16.  Partial A@XW sums live only in the
    f32 scratch.  Dropout(p=0.3) is identity in eval/inference mode.
    """
    k = pl.program_id(1)

    @pl.when(k == 0)
    def _():
        acc_ref[...] = jnp.zeros_like(acc_ref)

    a = a_ref[...].astype(jnp.bfloat16)
    acc_ref[...] += jnp.dot(a, xw_ref[...], preferred_element_type=jnp.float32)

    @pl.when(k == pl.num_programs(1) - 1)
    def _():
        h = jnp.maximum(acc_ref[...] + b_ref[...], 0.0)     # bias + ReLU in f32
        o_ref[...] = jnp.dot(
            h.astype(wn_ref.dtype), wn_ref[...],
            preferred_element_type=jnp.float32).astype(o_ref.dtype)


def _agg_logsoftmax_kernel(a_ref, xw_ref, b_ref, o_ref, acc_ref):
    """o = log_softmax(A @ XW + b). Padded-class mask is pre-baked into b (-1e30)."""
    k = pl.program_id(1)

    @pl.when(k == 0)
    def _():
        acc_ref[...] = jnp.zeros_like(acc_ref)

    a = a_ref[...].astype(jnp.bfloat16)
    acc_ref[...] += jnp.dot(a, xw_ref[...], preferred_element_type=jnp.float32)

    @pl.when(k == pl.num_programs(1) - 1)
    def _():
        logits = acc_ref[...] + b_ref[...]     # f32; padded classes get -1e30
        m = jnp.max(logits, axis=-1, keepdims=True)
        lse = jnp.log(jnp.sum(jnp.exp(logits - m), axis=-1, keepdims=True)) + m
        o_ref[...] = logits - lse


# ---------------------------------------------------------------------------
# Graph preprocessing (plain JAX glue)
# ---------------------------------------------------------------------------

def build_norm_adj_padded(edge_index, num_nodes, padded_nodes, out_dtype=jnp.int8):
    """Dense A_hat = D^{-1/2}(A+I)D^{-1/2} (PyG gcn_norm semantics, scatter-add so
    duplicate edges keep multiplicity), built directly at padded size and in its
    final storage dtype.  For a static graph, hoist this out of the per-forward
    path and reuse the result.
    """
    src, dst = edge_index[0], edge_index[1]
    a = jnp.zeros((padded_nodes, padded_nodes), jnp.float32)
    a = a.at[dst, src].add(1.0)                       # A[i, j]: message j -> i
    a = a - jnp.diag(jnp.diagonal(a))                 # drop existing self loops
    self_loops = (jnp.arange(padded_nodes) < num_nodes).astype(jnp.float32)
    a = a + jnp.diag(self_loops)                      # weight-1 self loops (real nodes)
    deg = jnp.sum(a, axis=1)
    dinv = jnp.where(deg > 0, jax.lax.rsqrt(deg), 0.0)
    a = a * dinv[:, None] * dinv[None, :]
    if out_dtype == jnp.int8:
        return jnp.round(a * _ADJ_QSCALE).astype(jnp.int8)
    return a.astype(out_dtype)


# ---------------------------------------------------------------------------
# Forward pass
# ---------------------------------------------------------------------------

def scrna_gnn_forward(x, edge_index, params, *, row_tile=256, node_k_tile=512,
                      feat_k_tile=512, quantize_adj=True):
    n, f = x.shape
    h1 = params["w1"].shape[1]
    h2 = params["w2"].shape[1]
    c = params["w3"].shape[1]

    # Lane padding of hidden/class dims.
    h1_p, h2_p, c_p = (_round_up(d, 128) for d in (h1, h2, c))

    # Row tile: multiple of 32 (int8 sublane packing), default 256 (MXU-sized).
    n_128 = _round_up(n, 128)
    tm = _round_up(min(row_tile, n_128), 32)
    tk_n = _round_up(min(node_k_tile, n_128), 128)
    # Node padding keeps an even number of row tiles (v7x's 2 TensorCores share
    # the "parallel" row axis) and divides by both tm and tk_n.
    n_p = _round_up(n, _lcm(2 * tm, tk_n))

    f_128 = _round_up(f, 128)
    tk_f = _round_up(min(feat_k_tile, f_128), 128)
    f_p = _round_up(f, tk_f)

    adj_dtype = jnp.int8 if quantize_adj else jnp.bfloat16
    a_bytes = 1 if quantize_adj else 2
    a_q = build_norm_adj_padded(edge_index, n, n_p, out_dtype=adj_dtype)

    x_p = jnp.pad(x, ((0, n_p - n), (0, f_p - f))).astype(jnp.bfloat16)

    def pad2(w, rp, cp):
        return jnp.pad(w, ((0, rp - w.shape[0]), (0, cp - w.shape[1])))

    # Fold the A dequant scale (1/127) into the weights producing the operand of
    # the following aggregation -> kernels never see the scale.
    wscale = (1.0 / _ADJ_QSCALE) if quantize_adj else 1.0
    w1 = (pad2(params["w1"], f_p, h1_p) * wscale).astype(jnp.bfloat16)
    w2 = (pad2(params["w2"], h1_p, h2_p) * wscale).astype(jnp.bfloat16)
    w3 = (pad2(params["w3"], h2_p, c_p) * wscale).astype(jnp.bfloat16)
    b1 = pad2(params["b1"], 1, h1_p).astype(jnp.float32)
    b2 = pad2(params["b2"], 1, h2_p).astype(jnp.float32)
    b3 = pad2(params["b3"], 1, c_p).astype(jnp.float32)
    b3 = b3.at[:, c:].set(-1e30)       # padded-class mask baked into the bias

    n_tiles = n_p // tm
    k_nodes = n_p // tk_n
    k_feat = f_p // tk_f

    def cparams(vmem_bytes):
        # Explicit scoped-VMEM budget: 2x headroom, capped well under v7x's 64 MiB.
        return pltpu.CompilerParams(
            dimension_semantics=("parallel", "arbitrary"),
            vmem_limit_bytes=int(min(max(2 * vmem_bytes + (1 << 20), 4 << 20),
                                     60 << 20)))

    # Constant-index resident blocks: single buffer (their block index never changes).
    def const_spec(rows, cols):
        return pl.BlockSpec((rows, cols), lambda i, k: (0, 0),
                            pipeline_mode=pl.Buffered(1))

    def row_out_spec(cols):
        return pl.BlockSpec((tm, cols), lambda i, k: (i, 0))

    # ---- stage 0: XW1 = X @ W1, K-tiled over genes ----
    vmem0 = (2 * tm * tk_f * 2 + 2 * tk_f * h1_p * 2
             + 2 * tm * h1_p * 2 + tm * h1_p * 4)
    xw1 = pl.pallas_call(
        _transform_kernel,
        grid=(n_tiles, k_feat),
        in_specs=[pl.BlockSpec((tm, tk_f), lambda i, k: (i, k)),
                  pl.BlockSpec((tk_f, h1_p), lambda i, k: (k, 0))],
        out_specs=row_out_spec(h1_p),
        out_shape=jax.ShapeDtypeStruct((n_p, h1_p), jnp.bfloat16),
        scratch_shapes=[pltpu.VMEM((tm, h1_p), jnp.float32)],
        compiler_params=cparams(vmem0),
        cost_estimate=pl.CostEstimate(
            flops=2 * n_p * f_p * h1_p,
            transcendentals=0,
            bytes_accessed=2 * (n_p * f_p + n_tiles * f_p * h1_p + n_p * h1_p)),
    )(x_p, w1)

    # ---- stages 1-3: K-tiled aggregation over nodes ----
    a_spec = pl.BlockSpec((tm, tk_n), lambda i, k: (i, k))
    # NOTE: sweep pipeline_mode=pl.Buffered(2..3) on a_spec / xw_spec on v6e/v7x.

    def xw_spec(cols):
        return pl.BlockSpec((tk_n, cols), lambda i, k: (k, 0))

    def agg_vmem(h_in, h_out, wn_bytes, out_bytes):
        return (2 * tm * tk_n * a_bytes + 2 * tk_n * h_in * 2 + h_in * 4
                + wn_bytes + 2 * tm * h_out * out_bytes + tm * h_in * 4)

    def agg_cost(h_in, h_out, out_bytes, second_matmul=True, transcendentals=0):
        flops = 2 * n_p * n_p * h_in
        if second_matmul:
            flops += 2 * n_p * h_in * h_out
        return pl.CostEstimate(
            flops=flops, transcendentals=transcendentals,
            bytes_accessed=(n_p * n_p * a_bytes + n_tiles * n_p * h_in * 2
                            + n_p * h_out * out_bytes + h_in * h_out * 2 + h_in * 4))

    # stage 1: H1W2 = relu(A @ XW1 + b1) @ W2
    h1w2 = pl.pallas_call(
        _agg_relu_transform_kernel,
        grid=(n_tiles, k_nodes),
        in_specs=[a_spec, xw_spec(h1_p),
                  const_spec(1, h1_p), const_spec(h1_p, h2_p)],
        out_specs=row_out_spec(h2_p),
        out_shape=jax.ShapeDtypeStruct((n_p, h2_p), jnp.bfloat16),
        scratch_shapes=[pltpu.VMEM((tm, h1_p), jnp.float32)],
        compiler_params=cparams(agg_vmem(h1_p, h2_p, h1_p * h2_p * 2, 2)),
        cost_estimate=agg_cost(h1_p, h2_p, 2),
    )(a_q, xw1, b1, w2)

    # stage 2: H2W3 = relu(A @ H1W2 + b2) @ W3
    h2w3 = pl.pallas_call(
        _agg_relu_transform_kernel,
        grid=(n_tiles, k_nodes),
        in_specs=[a_spec, xw_spec(h2_p),
                  const_spec(1, h2_p), const_spec(h2_p, c_p)],
        out_specs=row_out_spec(c_p),
        out_shape=jax.ShapeDtypeStruct((n_p, c_p), jnp.bfloat16),
        scratch_shapes=[pltpu.VMEM((tm, h2_p), jnp.float32)],
        compiler_params=cparams(agg_vmem(h2_p, c_p, h2_p * c_p * 2, 2)),
        cost_estimate=agg_cost(h2_p, c_p, 2),
    )(a_q, h1w2, b2, w3)

    # stage 3: out = log_softmax(A @ H2W3 + b3)
    out_p = pl.pallas_call(
        _agg_logsoftmax_kernel,
        grid=(n_tiles, k_nodes),
        in_specs=[a_spec, xw_spec(c_p), const_spec(1, c_p)],
        out_specs=row_out_spec(c_p),
        out_shape=jax.ShapeDtypeStruct((n_p, c_p), jnp.float32),
        scratch_shapes=[pltpu.VMEM((tm, c_p), jnp.float32)],
        compiler_params=cparams(agg_vmem(c_p, c_p, 0, 4)),
        cost_estimate=agg_cost(c_p, c_p, 4, second_matmul=False,
                               transcendentals=n_p * c_p),
    )(a_q, h2w3, b3)

    return out_p[:n, :c]


# ---------------------------------------------------------------------------
# Parameter init (Glorot-style, matching GCNConv shapes)
# ---------------------------------------------------------------------------

def init_params(key, num_features, num_classes, hidden_dim):
    k1, k2, k3 = jax.random.split(key, 3)

    def glorot(k, fan_in, fan_out):
        scale = jnp.sqrt(6.0 / (fan_in + fan_out))
        return jax.random.uniform(k, (fan_in, fan_out), jnp.float32, -scale, scale)

    h2 = hidden_dim // 2
    return {
        "w1": glorot(k1, num_features, hidden_dim),
        "b1": jnp.zeros((1, hidden_dim), jnp.float32),
        "w2": glorot(k2, hidden_dim, h2),
        "b2": jnp.zeros((1, h2), jnp.float32),
        "w3": glorot(k3, h2, num_classes),
        "b3": jnp.zeros((1, num_classes), jnp.float32),
    }


if __name__ == "__main__":
    # small synthetic scRNA graph: 192 cells, 192 genes, hidden_dim=64, 8 classes
    num_nodes = 192
    num_features = 192
    hidden_dim = 64
    num_classes = 8

    key = jax.random.PRNGKey(0)
    kx, ke, kp = jax.random.split(key, 3)

    x = jax.random.normal(kx, (num_nodes, num_features), jnp.float32)

    # random undirected edges (both directions stored, PyG convention), no self loops
    num_undirected = 384
    src = jax.random.randint(ke, (num_undirected,), 0, num_nodes)
    dst = (src + 1 + jax.random.randint(jax.random.fold_in(ke, 1),
                                        (num_undirected,), 0, num_nodes - 1)) % num_nodes
    edge_index = jnp.stack([jnp.concatenate([src, dst]),
                            jnp.concatenate([dst, src])], axis=0).astype(jnp.int32)

    params = init_params(kp, num_features, num_classes, hidden_dim)

    # small tiles so the row-tiled + K-tiled pipelined path is really exercised
    # (4 row tiles x 2 node-K steps x 2 feature-K steps at these shapes)
    out = scrna_gnn_forward(x, edge_index, params,
                            row_tile=64, node_k_tile=128, feat_k_tile=128)
    jax.block_until_ready(out)

    # plain-JAX f32 reference
    a = jnp.zeros((num_nodes, num_nodes), jnp.float32)
    a = a.at[edge_index[1], edge_index[0]].add(1.0)
    a = a - jnp.diag(jnp.diagonal(a)) + jnp.eye(num_nodes, dtype=jnp.float32)
    deg = jnp.sum(a, axis=1)
    dinv = jnp.where(deg > 0, jax.lax.rsqrt(deg), 0.0)
    a_ref = a * dinv[:, None] * dinv[None, :]

    h = jnp.maximum(a_ref @ (x @ params["w1"]) + params["b1"], 0.0)
    h = jnp.maximum(a_ref @ (h @ params["w2"]) + params["b2"], 0.0)
    logits = a_ref @ (h @ params["w3"]) + params["b3"]
    ref = jax.nn.log_softmax(logits, axis=1)

    assert out.shape == (num_nodes, num_classes)
    # rows of log_softmax must exponentiate-sum to 1
    assert jnp.allclose(jnp.sum(jnp.exp(out), axis=1), 1.0, atol=1e-3)
    # int8-A + bf16-matmul path vs f32 reference (loose tolerance for quant/bf16)
    err = float(jnp.max(jnp.abs(out - ref)))
    assert err < 0.25, err
    print("KERNEL_OK")
</pallas_src>

<mosaic_0001>
module attributes {stable_mosaic.version = 11 : i64} {
  func.func @_transform_kernel(%arg0: i32, %arg1: i32, %arg2: memref<64x128xbf16, #tpu.memory_space<vmem>>, %arg3: memref<128x128xbf16, #tpu.memory_space<vmem>>, %arg4: memref<64x128xbf16, #tpu.memory_space<vmem>>, %arg5: memref<64x128xf32, #tpu.memory_space<vmem>>) attributes {dimension_semantics = [#tpu.dimension_semantics<parallel>, #tpu.dimension_semantics<arbitrary>], iteration_bounds = array<i64: 4, 2>, scalar_prefetch = 0 : i64, scratch_operands = 1 : i64, tpu.core_type = #tpu.core_type<tc>, window_params = [{transform_indices = @transform_0, window_bounds = array<i64: 64, 128>}, {transform_indices = @transform_1, window_bounds = array<i64: 128, 128>}, {transform_indices = @transform_2, window_bounds = array<i64: 64, 128>}]} {
    %c0_i32 = arith.constant 0 : i32
    %0 = arith.cmpi eq, %arg1, %c0_i32 : i32
    %1 = arith.extui %0 : i1 to i32
    %c0_i32_0 = arith.constant 0 : i32
    %2 = arith.cmpi ne, %1, %c0_i32_0 : i32
    scf.if %2 {
      %cst_9 = arith.constant 0.000000e+00 : f32
      %12 = vector.broadcast %cst_9 : f32 to vector<64x128xf32>
      %c0_10 = arith.constant 0 : index
      %c0_11 = arith.constant 0 : index
      %13 = vector.load %arg5[%c0_10, %c0_11] : memref<64x128xf32, #tpu.memory_space<vmem>>, vector<64x128xf32>
      tpu.vector_store %arg5[%c0_10, %c0_11], %12 {strides = array<i32>} : memref<64x128xf32, #tpu.memory_space<vmem>>, vector<64x128xf32>,
    } else {
    }
    %c0 = arith.constant 0 : index
    %c0_1 = arith.constant 0 : index
    %3 = vector.load %arg5[%c0, %c0_1] : memref<64x128xf32, #tpu.memory_space<vmem>>, vector<64x128xf32>
    %c0_2 = arith.constant 0 : index
    %c0_3 = arith.constant 0 : index
    %4 = vector.load %arg2[%c0_2, %c0_3] : memref<64x128xbf16, #tpu.memory_space<vmem>>, vector<64x128xbf16>
    %c0_4 = arith.constant 0 : index
    %c0_5 = arith.constant 0 : index
    %5 = vector.load %arg3[%c0_4, %c0_5] : memref<128x128xbf16, #tpu.memory_space<vmem>>, vector<128x128xbf16>
    %cst = arith.constant dense<0.000000e+00> : vector<64x128xf32>
    %6 = tpu.matmul %4, %5, %cst {dimension_numbers = #tpu.dot_dimension_numbers<[1], [0], [0], [1], [0, 0, 1, 1], [], []>} : vector<64x128xbf16>, vector<128x128xbf16>, vector<64x128xf32> -> vector<64x128xf32>
    %7 = arith.addf %3, %6 : vector<64x128xf32>
    %c0_6 = arith.constant 0 : index
    %c0_7 = arith.constant 0 : index
    %8 = vector.load %arg5[%c0_6, %c0_7] : memref<64x128xf32, #tpu.memory_space<vmem>>, vector<64x128xf32>
    tpu.vector_store %arg5[%c0_6, %c0_7], %7 {strides = array<i32>} : memref<64x128xf32, #tpu.memory_space<vmem>>, vector<64x128xf32>,
    %c1_i32 = arith.constant 1 : i32
    %9 = arith.cmpi eq, %arg1, %c1_i32 : i32
    %10 = arith.extui %9 : i1 to i32
    %c0_i32_8 = arith.constant 0 : i32
    %11 = arith.cmpi ne, %10, %c0_i32_8 : i32
    scf.if %11 {
      %c0_9 = arith.constant 0 : index
      %c0_10 = arith.constant 0 : index
      %12 = vector.load %arg5[%c0_9, %c0_10] : memref<64x128xf32, #tpu.memory_space<vmem>>, vector<64x128xf32>
      %13 = arith.truncf %12 : vector<64x128xf32> to vector<64x128xbf16>
      %c0_11 = arith.constant 0 : index
      %c0_12 = arith.constant 0 : index
      %14 = vector.load %arg4[%c0_11, %c0_12] : memref<64x128xbf16, #tpu.memory_space<vmem>>, vector<64x128xbf16>
      tpu.vector_store %arg4[%c0_11, %c0_12], %13 {strides = array<i32>} : memref<64x128xbf16, #tpu.memory_space<vmem>>, vector<64x128xbf16>,
    } else {
    }
    return
  }
  func.func @transform_0(%arg0: i32, %arg1: i32) -> (i32, i32) {
    %c0_i32 = arith.constant 0 : i32
    return %arg0, %arg1 : i32, i32
  }
  func.func @transform_1(%arg0: i32, %arg1: i32) -> (i32, i32) {
    %c0_i32 = arith.constant 0 : i32
    %c0_i32_0 = arith.constant 0 : i32
    return %arg1, %c0_i32 : i32, i32
  }
  func.func @transform_2(%arg0: i32, %arg1: i32) -> (i32, i32) {
    %c0_i32 = arith.constant 0 : i32
    %c0_i32_0 = arith.constant 0 : i32
    return %arg0, %c0_i32 : i32, i32
  }
}

</mosaic_0001>

<llo_original>
// kernel: tpu_custom_call.1
$region0: #{tpu_custom_call.1}
  #allocation0 [shape = 'u32[]', space=smem, size = 0x4, offset = 0x4, fixed_abs, tag = 'smem constant byte address 0x4 - core index']
  #allocation1 [shape = 'u32[144,128]{1,0:T(1,128)}', space=vmem, size = 0x12000, scoped, tag = 'internal scratch']
  #allocation2 [shape = 'f32[64,128]{1,0:T(8,128)}', space=vmem, size = 0x8000, scoped, tag = 'scratch operand']
  %s0 = inlined_call_operand.hbm [shape: bf16[256,256], index: 0, kind: input, shape index: {}]
  %s1 = inlined_call_operand.hbm [shape: bf16[256,128], index: 1, kind: input, shape index: {}]
  %s2 = inlined_call_operand.hbm [shape: bf16[256,128], index: 2, kind: output, shape index: {}]
  %s3 = sld [smem:[#allocation0]]
  $region57: #{tpu_custom_call.1} parent=0
    _
  %s5 = ssub.s32 1, %s3
  %s6 = scalar_select 0, %s5, %s3
  $region1: #{tpu_custom_call.1} parent=0
    #allocation3 [shape = 'u8[32768]{0}', space=vmem, size = 0x8000, scoped, tag = 'input window, operand 0']
    #allocation4 [shape = 's32[2]{0}', space=sflag, size = 0x8, scoped, tag = 'scoped memory for tpu_custom_call.1']
    #allocation5 [shape = 's32[2]{0}', space=sflag, size = 0x8, scoped, tag = 'scoped memory for tpu_custom_call.1']
    #allocation6 [shape = 'u8[65536]{0}', space=vmem, size = 0x10000, scoped, tag = 'input window, operand 1']
    #allocation7 [shape = 's32[2]{0}', space=sflag, size = 0x8, scoped, tag = 'scoped memory for tpu_custom_call.1']
    #allocation8 [shape = 'u8[32768]{0}', space=vmem, size = 0x8000, scoped, tag = 'output window, operand 0']
    %7 = vsyncpa [#allocation4], 0
    %s8 = scalar_lea.sflag [#allocation4], 1
    %9 = vsyncpa %s8, 0
    %10 = vsyncpa [#allocation7], 0
    %s11 = scalar_lea.sflag [#allocation7], 1
    %12 = vsyncpa %s11, 0
    %13 = vsyncpa [#allocation5], 0
    %s14 = scalar_lea.sflag [#allocation5], 1
    %15 = vsyncpa %s14, 0
    loop: start=0, step=1, limit=10
    $region2: #{tpu_custom_call.1} parent=1 // loop_pre_header
      _
    $region3: #{tpu_custom_call.1} parent=1 // loop_header
      %s17 = sphi 0, %s21
      %p18 = scmp.ge.s32.totalorder %s17, 10
      %s24 = sphi 0, %s36
      %s25 = sphi 0, %s32
      %s26 = sphi 0, %s24
      %s27 = sphi 0, %s25
      %s28 = sphi 0, %s26
      %s29 = sphi 0, %s27
      %s41 = sphi 0, %s43
      %s44 = sphi 0, %s41
      %s45 = sphi 0, %s44
      %s61 = sphi 0, %s45
      %s67 = sphi 0, %s69
      %s70 = sphi 0, %s67
      %s71 = sphi 0, %s70
      %s87 = sphi 0, %s71
      %s93 = sphi 0, %s95
      %s96 = sphi 0, %s93
      %s97 = sphi 0, %s96
      %s113 = sphi 0, %s97
    $region4: #{tpu_custom_call.1} parent=1 // loop_header_branch
      %20 = sbr.rel (%p18) target = $region8
    $region5: #{tpu_custom_call.1} parent=1 // loop_body
      %s22 = ssub.s32 %s17, 1
      %s23 = ssub.s32 %s17, 2
      %s30 = sadd.s32 1, %s25
      %p31 = scmp.ge.s32.totalorder %s30, 2
      %s32 = scalar_select %p31, 0, %s30
      %s33 = sadd.s32 1, %s24
      %s34 = scalar_select %p31, %s33, %s24
      %p35 = scmp.ge.s32.totalorder %s34, 4
      %s36 = scalar_select %p35, 0, %s34
      %s37 = ssub.s32 %s24, %s36
      %s38 = ssub.s32 %s25, %s32
      %s39 = sor.u32 %s37, %s38
      %p40 = scmp.eq.s32.totalorder %s39, 0
      %s42 = sadd.s32 %s41, 1
      %s43 = scalar_select %p40, %s41, %s42
      %p46 = pneg %p40
      %p47 = scmp.eq.s32.totalorder %s17, 7
      %p48 = por %p46, %p47
      %p49 = scmp.ne.s32.totalorder %s41, %s44
      %p50 = scmp.eq.s32.totalorder %s17, 0
      %p51 = por %p49, %p50
      %p52 = scmp.ne.s32.totalorder %s41, %s44
      %p53 = scmp.eq.s32.totalorder %s22, 7
      %p54 = por %p52, %p53
      %p55 = scmp.ne.s32.totalorder %s44, %s45
      %p56 = scmp.eq.s32.totalorder %s22, 0
      %p57 = por %p55, %p56
      %p58 = scmp.ne.s32.totalorder %s44, %s45
      %p59 = scmp.eq.s32.totalorder %s23, 7
      %p60 = por %p58, %p59
      %p62 = scmp.ne.s32.totalorder %s45, %s61
      %p63 = scmp.eq.s32.totalorder %s23, 0
      %p64 = por %p62, %p63
      %s65 = ssub.s32 %s25, %s32
      %p66 = scmp.eq.s32.totalorder %s65, 0
      %s68 = sadd.s32 %s67, 1
      %s69 = scalar_select %p66, %s67, %s68
      %p72 = pneg %p66
      %p73 = scmp.eq.s32.totalorder %s17, 7
      %p74 = por %p72, %p73
      %p75 = scmp.ne.s32.totalorder %s67, %s70
      %p76 = scmp.eq.s32.totalorder %s17, 0
      %p77 = por %p75, %p76
      %p78 = scmp.ne.s32.totalorder %s67, %s70
      %p79 = scmp.eq.s32.totalorder %s22, 7
      %p80 = por %p78, %p79
      %p81 = scmp.ne.s32.totalorder %s70, %s71
      %p82 = scmp.eq.s32.totalorder %s22, 0
      %p83 = por %p81, %p82
      %p84 = scmp.ne.s32.totalorder %s70, %s71
      %p85 = scmp.eq.s32.totalorder %s23, 7
      %p86 = por %p84, %p85
      %p88 = scmp.ne.s32.totalorder %s71, %s87
      %p89 = scmp.eq.s32.totalorder %s23, 0
      %p90 = por %p88, %p89
      %s91 = ssub.s32 %s24, %s36
      %p92 = scmp.eq.s32.totalorder %s91, 0
      %s94 = sadd.s32 %s93, 1
      %s95 = scalar_select %p92, %s93, %s94
      %p98 = pneg %p92
      %p99 = scmp.eq.s32.totalorder %s17, 7
      %p100 = por %p98, %p99
      %p101 = scmp.ne.s32.totalorder %s93, %s96
      %p102 = scmp.eq.s32.totalorder %s17, 0
      %p103 = por %p101, %p102
      %p104 = scmp.ne.s32.totalorder %s93, %s96
      %p105 = scmp.eq.s32.totalorder %s22, 7
      %p106 = por %p104, %p105
      %p107 = scmp.ne.s32.totalorder %s96, %s97
      %p108 = scmp.eq.s32.totalorder %s22, 0
      %p109 = por %p107, %p108
      %p110 = scmp.ne.s32.totalorder %s96, %s97
      %p111 = scmp.eq.s32.totalorder %s23, 7
      %p112 = por %p110, %p111
      %p114 = scmp.ne.s32.totalorder %s97, %s113
      %p115 = scmp.eq.s32.totalorder %s23, 0
      %p116 = por %p114, %p115
      %p117 = scmp.le.s32.totalorder 1, %s17
      %p118 = scmp.lt.s32.totalorder %s17, 9
      %p119 = pnand %p117, %p118
      %p120 = pneg %p119
      // Predicated region
      $region9: #{tpu_custom_call.1} parent=5 // pred_check
        _
      $region10: #{tpu_custom_call.1} parent=5 // pred_check_branch
        %122 = sbr.rel (%p119) target = $region12
      $region11: #{tpu_custom_call.1} parent=5 // pred_region
        %s123 = ssub.s32 %s17, 1
      $region12: #{tpu_custom_call.1} parent=5 // pred_fallthru
        _
      %p124 = scmp.lt.s32.totalorder %s17, 8
      // Predicated region
      $region13: #{tpu_custom_call.1} parent=5 // pred_check
        %p125 = pneg %p124
      $region14: #{tpu_custom_call.1} parent=5 // pred_check_branch
        %127 = sbr.rel (%p125) target = $region16
      $region15: #{tpu_custom_call.1} parent=5 // pred_region
        // Predicated region
        $region17: #{tpu_custom_call.1} parent=15 // pred_check
          %p128 = pneg %p51
        $region18: #{tpu_custom_call.1} parent=15 // pred_check_branch
          %130 = sbr.rel (%p128) target = $region20
        $region19: #{tpu_custom_call.1} parent=15 // pred_region
          %s131 = sand.u32 %s41, 1
          %s132 = scalar_lea.sflag [#allocation4], %s131
          %s133 = sand.u32 %s41, 1
          %s134 = smul.addr %s133, 32
          %s135 = scalar_lea.vmem [#allocation3], %s134
          %s136 = smul.u32 8, %s24
          %s138 = ssub.s32 512, 512
          %139 = vsyncadd %s132, %s138
          %s140 = smul.addr %s136, 2
          %s141 = sadd.s32 %s25, %s140
          %s142 = smul.addr %s141, 64
          %s143 = scalar_lea.hbm %s0, %s142
          %s144 = sshll.u32 %s135, 4
          %s145 = int_to_ptr.vmem [resolvable:$true] %s144
          %150 = dma.hbm_to_vmem [thread:$0]  %s143, 512, %s145, %s132, 128, 64, 4
        $region20: #{tpu_custom_call.1} parent=15 // pred_fallthru
          _
        // Predicated region
        $region21: #{tpu_custom_call.1} parent=15 // pred_check
          %p151 = pneg %p77
        $region22: #{tpu_custom_call.1} parent=15 // pred_check_branch
          %153 = sbr.rel (%p151) target = $region24
        $region23: #{tpu_custom_call.1} parent=15 // pred_region
          %s154 = sand.u32 %s67, 1
          %s155 = scalar_lea.sflag [#allocation7], %s154
          %s156 = sand.u32 %s67, 1
          %s157 = smul.addr %s156, 64
          %s158 = scalar_lea.vmem [#allocation6], %s157
          %s159 = smul.u32 16, %s25
          %s161 = ssub.s32 1024, 1024
          %162 = vsyncadd %s155, %s161
          %s163 = smul.addr %s159, 64
          %s164 = scalar_lea.hbm %s1, %s163
          %s165 = sshll.u32 %s158, 4
          %s166 = int_to_ptr.vmem [resolvable:$true] %s165
          %171 = dma.hbm_to_vmem [thread:$0]  %s164, 1024, %s166, %s155, 64, 64, 4
        $region24: #{tpu_custom_call.1} parent=15 // pred_fallthru
          _
      $region16: #{tpu_custom_call.1} parent=5 // pred_fallthru
        _
      %p172 = scmp.le.s32.totalorder 1, %s17
      %p173 = scmp.lt.s32.totalorder %s17, 9
      %p174 = pnand %p172, %p173
      %p175 = pneg %p174
      // Predicated region
      $region25: #{tpu_custom_call.1} parent=5 // pred_check
        _
      $region26: #{tpu_custom_call.1} parent=5 // pred_check_branch
        %177 = sbr.rel (%p174) target = $region28
      $region27: #{tpu_custom_call.1} parent=5 // pred_region
        %s178 = ssub.s32 %s17, 1
        %s179 = sand.u32 %s44, 1
        %s180 = scalar_lea.sflag [#allocation4], %s179
        %s181 = sand.u32 %s44, 1
        %s182 = smul.addr %s181, 32
        %s183 = scalar_lea.vmem [#allocation3], %s182
        // Predicated region
        $region29: #{tpu_custom_call.1} parent=27 // pred_check
          %p184 = pneg %p57
        $region30: #{tpu_custom_call.1} parent=27 // pred_check_branch
          %186 = sbr.rel (%p184) target = $region32
        $region31: #{tpu_custom_call.1} parent=27 // pred_region
          %187 = dma.done %s180, 512
        $region32: #{tpu_custom_call.1} parent=27 // pred_fallthru
          _
        %s188 = sand.u32 %s70, 1
        %s189 = scalar_lea.sflag [#allocation7], %s188
        %s190 = sand.u32 %s70, 1
        %s191 = smul.addr %s190, 64
        %s192 = scalar_lea.vmem [#allocation6], %s191
        // Predicated region
        $region33: #{tpu_custom_call.1} parent=27 // pred_check
          %p193 = pneg %p83
        $region34: #{tpu_custom_call.1} parent=27 // pred_check_branch
          %195 = sbr.rel (%p193) target = $region36
        $region35: #{tpu_custom_call.1} parent=27 // pred_region
          %196 = dma.done %s189, 1024
        $region36: #{tpu_custom_call.1} parent=27 // pred_fallthru
          _
        %s197 = sand.u32 %s44, 1
        %s198 = scalar_lea.sflag [#allocation4], %s197
        %s199 = sand.u32 %s44, 1
        %s200 = smul.addr %s199, 32
        %s201 = scalar_lea.vmem [#allocation3], %s200
        %p202 = pneg %p57
        %p203 = pneg %p54
        %s204 = sand.u32 %s70, 1
        %s205 = scalar_lea.sflag [#allocation7], %s204
        %s206 = sand.u32 %s70, 1
        %s207 = smul.addr %s206, 64
        %s208 = scalar_lea.vmem [#allocation6], %s207
        %p209 = pneg %p83
        %p210 = pneg %p80
        %p211 = pneg %p109
        %p212 = pneg %p106
        %s213 = sand.u32 %s96, 1
        %s214 = scalar_lea.sflag [#allocation5], %s213
        %s215 = sand.u32 %s96, 1
        %s216 = smul.addr %s215, 32
        %s217 = scalar_lea.vmem [#allocation8], %s216
        %s218 = smul.u32 8, %s26
        %s219 = smul.u32 16, %s27
        %s220 = smul.u32 8, %s26
        %p222 = scmp.eq.s32.totalorder %s27, 0
        // Predicated region
        $region37: #{tpu_custom_call.1} parent=27 // pred_check
          %p223 = pneg %p222
        $region38: #{tpu_custom_call.1} parent=27 // pred_check_branch
          %225 = sbr.rel (%p223) target = $region40
        $region39: #{tpu_custom_call.1} parent=27 // pred_region
          %226 = vst [vmem:[#allocation2] sm:$0xff] 0.0
          %227 = vst [vmem:[#allocation2 + $0x8] sm:$0xff] 0.0
          %228 = vst [vmem:[#allocation2 + $0x10] sm:$0xff] 0.0
          %229 = vst [vmem:[#allocation2 + $0x18] sm:$0xff] 0.0
          %230 = vst [vmem:[#allocation2 + $0x20] sm:$0xff] 0.0
          %231 = vst [vmem:[#allocation2 + $0x28] sm:$0xff] 0.0
          %232 = vst [vmem:[#allocation2 + $0x30] sm:$0xff] 0.0
          %233 = vst [vmem:[#allocation2 + $0x38] sm:$0xff] 0.0
        $region40: #{tpu_custom_call.1} parent=27 // pred_fallthru
          _
        %v234 = vld [vmem:[#allocation2] sm:$0xff]
        %v235 = vld [vmem:[#allocation2 + $0x8] sm:$0xff]
        %v236 = vld [vmem:[#allocation2 + $0x10] sm:$0xff]
        %v237 = vld [vmem:[#allocation2 + $0x18] sm:$0xff]
        %v238 = vld [vmem:[#allocation2 + $0x20] sm:$0xff]
        %v239 = vld [vmem:[#allocation2 + $0x28] sm:$0xff]
        %v240 = vld [vmem:[#allocation2 + $0x30] sm:$0xff]
        %v241 = vld [vmem:[#allocation2 + $0x38] sm:$0xff]
        %v242 = vld [vmem:[%s183] sm:$0xf]
        %v243 = vld [vmem:[%s183 + $0x4] sm:$0xf]
        %v244 = vld [vmem:[%s183 + $0x8] sm:$0xf]
        %v245 = vld [vmem:[%s183 + $0xc] sm:$0xf]
        %v246 = vld [vmem:[%s183 + $0x10] sm:$0xf]
        %v247 = vld [vmem:[%s183 + $0x14] sm:$0xf]
        %v248 = vld [vmem:[%s183 + $0x18] sm:$0xf]
        %v249 = vld [vmem:[%s183 + $0x1c] sm:$0xf]
        %v250 = vld [vmem:[%s192] sm:$0xf]
        %v251 = vld [vmem:[%s192 + $0x4] sm:$0xf]
        %v252 = vld [vmem:[%s192 + $0x8] sm:$0xf]
        %v253 = vld [vmem:[%s192 + $0xc] sm:$0xf]
        %v254 = vld [vmem:[%s192 + $0x10] sm:$0xf]
        %v255 = vld [vmem:[%s192 + $0x14] sm:$0xf]
        %v256 = vld [vmem:[%s192 + $0x18] sm:$0xf]
        %v257 = vld [vmem:[%s192 + $0x1c] sm:$0xf]
        %v258 = vld [vmem:[%s192 + $0x20] sm:$0xf]
        %v259 = vld [vmem:[%s192 + $0x24] sm:$0xf]
        %v260 = vld [vmem:[%s192 + $0x28] sm:$0xf]
        %v261 = vld [vmem:[%s192 + $0x2c] sm:$0xf]
        %v262 = vld [vmem:[%s192 + $0x30] sm:$0xf]
        %v263 = vld [vmem:[%s192 + $0x34] sm:$0xf]
        %v264 = vld [vmem:[%s192 + $0x38] sm:$0xf]
        %v265 = vld [vmem:[%s192 + $0x3c] sm:$0xf]
        %v274 = vunpack.c.l.b16 %v242
        %v275 = vunpack.c.l.b16 %v243
        %v276 = vunpack.c.l.b16 %v244
        %v277 = vunpack.c.l.b16 %v245
        %v278 = vunpack.c.l.b16 %v246
        %v279 = vunpack.c.l.b16 %v247
        %v280 = vunpack.c.l.b16 %v248
        %v281 = vunpack.c.l.b16 %v249
        %v282 = vpack.c.b16 %v275, %v274
        %v283 = vpack.c.b16 %v277, %v276
        %v284 = vpack.c.b16 %v279, %v278
        %v285 = vpack.c.b16 %v281, %v280
        %v306 = vunpack.c.l.b16 %v250
        %v307 = vunpack.c.l.b16 %v251
        %v308 = vunpack.c.l.b16 %v252
        %v309 = vunpack.c.l.b16 %v253
        %v310 = vunpack.c.l.b16 %v254
        %v311 = vunpack.c.l.b16 %v255
        %v312 = vunpack.c.l.b16 %v256
        %v313 = vunpack.c.l.b16 %v257
        %v314 = vunpack.c.l.b16 %v258
        %v315 = vunpack.c.l.b16 %v259
        %v316 = vunpack.c.l.b16 %v260
        %v317 = vunpack.c.l.b16 %v261
        %v318 = vunpack.c.l.b16 %v262
        %v319 = vunpack.c.l.b16 %v263
        %v320 = vunpack.c.l.b16 %v264
        %v321 = vunpack.c.l.b16 %v265
        %v322 = vpack.c.b16 %v307, %v306
        %v323 = vpack.c.b16 %v309, %v308
        %v324 = vpack.c.b16 %v311, %v310
        %v325 = vpack.c.b16 %v313, %v312
        %v326 = vpack.c.b16 %v315, %v314
        %v327 = vpack.c.b16 %v317, %v316
        %v328 = vpack.c.b16 %v319, %v318
        %v329 = vpack.c.b16 %v321, %v320
        %338 = vmatprep.subr.bf16.mxu0 0
        %339 = vmatpush1.bf16.msra.mxu0 %v329
        %340 = vmatprep.subr.bf16.mxu0 0
        %341 = vmatpush1.bf16.msra.mxu0 %v328
        %342 = vmatprep.subr.bf16.mxu0 0
        %343 = vmatpush1.bf16.msra.mxu0 %v327
        %344 = vmatprep.subr.bf16.mxu0 0
        %345 = vmatpush1.bf16.msra.mxu0 %v326
        %346 = vmatprep.subr.bf16.mxu0 0
        %347 = vmatpush1.bf16.msra.mxu0 %v325
        %348 = vmatprep.subr.bf16.mxu0 0
        %349 = vmatpush1.bf16.msra.mxu0 %v324
        %350 = vmatprep.subr.bf16.mxu0 0
        %351 = vmatpush1.bf16.msra.mxu0 %v323
        %352 = vmatprep.subr.bf16.mxu0 0
        %353 = vmatpush1.bf16.msra.mxu0 %v322
        %354 = vmatprep.subr.bf16.mxu0 0
        %355 = vmatpush2.bf16.msra.mxu0 0
        %356 = vmatprep.subr.bf16.mxu0 0
        %357 = vmatpush2.bf16.msra.mxu0 0
        %358 = vmatprep.subr.bf16.mxu0 0
        %359 = vmatpush2.bf16.msra.mxu0 0
        %360 = vmatprep.subr.bf16.mxu0 0
        %361 = vmatpush2.bf16.msra.mxu0 0
        %362 = vmatprep.subr.bf16.mxu0 0
        %363 = vmatpush2.bf16.msra.mxu0 0
        %364 = vmatprep.subr.bf16.mxu0 0
        %365 = vmatpush2.bf16.msra.mxu0 0
        %366 = vmatprep.subr.bf16.mxu0 0
        %367 = vmatpush2.bf16.msra.mxu0 0
        %368 = vmatprep.subr.bf16.mxu0 0
        %369 = vmatpush2.bf16.msra.mxu0 0
        %370 = vmatprep.mubr.bf16.mxu0 0
        %371 = vmatmul.mubr.bf16.gmra.mxu0 %v282
        %v372 = vpop.f32.mrf.mxu0
        %v373 = vadd.f32 0.0, %v372
        %v374 = vpop.f32.mrf.mxu0
        %v375 = vpop.f32.mrf.mxu0
        %v376 = vadd.f32 0.0, %v375
        %v377 = vpop.f32.mrf.mxu0
        %378 = vmatprep.mubr.bf16.mxu0 0
        %379 = vmatmul.mubr.bf16.gmra.mxu0 %v283
        %v380 = vpop.f32.mrf.mxu0
        %v381 = vadd.f32 0.0, %v380
        %v382 = vpop.f32.mrf.mxu0
        %v383 = vpop.f32.mrf.mxu0
        %v384 = vadd.f32 0.0, %v383
        %v385 = vpop.f32.mrf.mxu0
        %386 = vmatprep.mubr.bf16.mxu0 0
        %387 = vmatmul.mubr.bf16.gmra.mxu0 %v284
        %v388 = vpop.f32.mrf.mxu0
        %v389 = vadd.f32 0.0, %v388
        %v390 = vpop.f32.mrf.mxu0
        %v391 = vpop.f32.mrf.mxu0
        %v392 = vadd.f32 0.0, %v391
        %v393 = vpop.f32.mrf.mxu0
        %394 = vmatprep.mubr.bf16.mxu0 0
        %395 = vmatmul.mubr.bf16.gmra.mxu0 %v285
        %v396 = vpop.f32.mrf.mxu0
        %v397 = vadd.f32 0.0, %v396
        %v398 = vpop.f32.mrf.mxu0
        %v399 = vpop.f32.mrf.mxu0
        %v400 = vadd.f32 0.0, %v399
        %v401 = vpop.f32.mrf.mxu0
        %402 = vdwg.mxu0
        %v403 = vadd.f32 %v234, %v373
        %v404 = vadd.f32 %v235, %v376
        %v405 = vadd.f32 %v236, %v381
        %v406 = vadd.f32 %v237, %v384
        %v407 = vadd.f32 %v238, %v389
        %v408 = vadd.f32 %v239, %v392
        %v409 = vadd.f32 %v240, %v397
        %v410 = vadd.f32 %v241, %v400
        %411 = vst [vmem:[#allocation2] sm:$0xff] %v403
        %412 = vst [vmem:[#allocation2 + $0x8] sm:$0xff] %v404
        %413 = vst [vmem:[#allocation2 + $0x10] sm:$0xff] %v405
        %414 = vst [vmem:[#allocation2 + $0x18] sm:$0xff] %v406
        %415 = vst [vmem:[#allocation2 + $0x20] sm:$0xff] %v407
        %416 = vst [vmem:[#allocation2 + $0x28] sm:$0xff] %v408
        %417 = vst [vmem:[#allocation2 + $0x30] sm:$0xff] %v409
        %418 = vst [vmem:[#allocation2 + $0x38] sm:$0xff] %v410
        %p419 = scmp.eq.s32.totalorder %s27, 1
        // Predicated region
        $region41: #{tpu_custom_call.1} parent=27 // pred_check
          %p420 = pneg %p419
        $region42: #{tpu_custom_call.1} parent=27 // pred_check_branch
          %422 = sbr.rel (%p420) target = $region44
        $region43: #{tpu_custom_call.1} parent=27 // pred_region
          %v423 = vld [vmem:[#allocation2] sm:$0xff]
          %v424 = vld [vmem:[#allocation2 + $0x8] sm:$0xff]
          %v425 = vld [vmem:[#allocation2 + $0x10] sm:$0xff]
          %v426 = vld [vmem:[#allocation2 + $0x18] sm:$0xff]
          %v427 = vld [vmem:[#allocation2 + $0x20] sm:$0xff]
          %v428 = vld [vmem:[#allocation2 + $0x28] sm:$0xff]
          %v429 = vld [vmem:[#allocation2 + $0x30] sm:$0xff]
          %v430 = vld [vmem:[#allocation2 + $0x38] sm:$0xff]
          %v431 = vpack.c.bf16 %v424, %v423
          %v432 = vpack.c.bf16 %v426, %v425
          %v433 = vpack.c.bf16 %v428, %v427
          %v434 = vpack.c.bf16 %v430, %v429
          %v439 = vunpack.c.l.b16 %v431
          %v440 = vunpack.c.h.b16 %v431
          %v441 = vunpack.c.l.b16 %v432
          %v442 = vunpack.c.h.b16 %v432
          %v443 = vunpack.c.l.b16 %v433
          %v444 = vunpack.c.h.b16 %v433
          %v445 = vunpack.c.l.b16 %v434
          %v446 = vunpack.c.h.b16 %v434
          %v447 = vpack.c.b16 %v439, %v439
          %v448 = vpack.c.b16 %v440, %v440
          %v449 = vpack.c.b16 %v441, %v441
          %v450 = vpack.c.b16 %v442, %v442
          %v451 = vpack.c.b16 %v443, %v443
          %v452 = vpack.c.b16 %v444, %v444
          %v453 = vpack.c.b16 %v445, %v445
          %v454 = vpack.c.b16 %v446, %v446
          %463 = vst [vmem:[%s217] sm:$0xf] %v447
          %464 = vst [vmem:[%s217 + $0x4] sm:$0xf] %v448
          %465 = vst [vmem:[%s217 + $0x8] sm:$0xf] %v449
          %466 = vst [vmem:[%s217 + $0xc] sm:$0xf] %v450
          %467 = vst [vmem:[%s217 + $0x10] sm:$0xf] %v451
          %468 = vst [vmem:[%s217 + $0x14] sm:$0xf] %v452
          %469 = vst [vmem:[%s217 + $0x18] sm:$0xf] %v453
          %470 = vst [vmem:[%s217 + $0x1c] sm:$0xf] %v454
        $region44: #{tpu_custom_call.1} parent=27 // pred_fallthru
          _
        %s471 = sand.u32 %s96, 1
        %s472 = scalar_lea.sflag [#allocation5], %s471
        %s473 = sand.u32 %s96, 1
        %s474 = smul.addr %s473, 32
        %s475 = scalar_lea.vmem [#allocation8], %s474
        // Predicated region
        $region45: #{tpu_custom_call.1} parent=27 // pred_check
          %p476 = pneg %p106
        $region46: #{tpu_custom_call.1} parent=27 // pred_check_branch
          %478 = sbr.rel (%p476) target = $region48
        $region47: #{tpu_custom_call.1} parent=27 // pred_region
          %s479 = smul.u32 8, %s26
          %s481 = ssub.s32 512, 512
          %482 = vsyncadd %s472, %s481
          %s483 = smul.addr %s479, 64
          %s484 = scalar_lea.hbm %s2, %s483
          %s485 = sshll.u32 %s475, 4
          %s486 = int_to_ptr.vmem [resolvable:$true] %s485
          %491 = dma.vmem_to_hbm [thread:$0]  %s486, 512, %s484, %s472, 64, 64, 4
        $region48: #{tpu_custom_call.1} parent=27 // pred_fallthru
          _
      $region28: #{tpu_custom_call.1} parent=5 // pred_fallthru
        _
      %p492 = scmp.le.s32.totalorder 2, %s17
      // Predicated region
      $region49: #{tpu_custom_call.1} parent=5 // pred_check
        %p493 = pneg %p492
      $region50: #{tpu_custom_call.1} parent=5 // pred_check_branch
        %495 = sbr.rel (%p493) target = $region52
      $region51: #{tpu_custom_call.1} parent=5 // pred_region
        %s496 = ssub.s32 %s17, 2
        // Predicated region
        $region53: #{tpu_custom_call.1} parent=51 // pred_check
          %p497 = pneg %p112
        $region54: #{tpu_custom_call.1} parent=51 // pred_check_branch
          %499 = sbr.rel (%p497) target = $region56
        $region55: #{tpu_custom_call.1} parent=51 // pred_region
          %s500 = sand.u32 %s97, 1
          %s501 = scalar_lea.sflag [#allocation5], %s500
          %s502 = sand.u32 %s97, 1
          %s503 = smul.addr %s502, 32
          %s504 = scalar_lea.vmem [#allocation8], %s503
          %505 = dma.done %s501, 512
        $region56: #{tpu_custom_call.1} parent=51 // pred_fallthru
          _
      $region52: #{tpu_custom_call.1} parent=5 // pred_fallthru
        _
    $region6: #{tpu_custom_call.1} parent=1 // loop_footer
      %s21 = sadd.s32 1, %s17
    $region7: #{tpu_custom_call.1} parent=1 // loop_footer_branch
      %16 = sbr.rel target = $region3
    $region8: #{tpu_custom_call.1} parent=1 // loop_exit
      _
    %506 = vsyncpa [#allocation4], 1
    %s507 = scalar_lea.sflag [#allocation4], 1
    %508 = vsyncpa %s507, 1
    %509 = vsyncpa [#allocation7], 1
    %s510 = scalar_lea.sflag [#allocation7], 1
    %511 = vsyncpa %s510, 1
    %512 = vsyncpa [#allocation5], 1
    %s513 = scalar_lea.sflag [#allocation5], 1
    %514 = vsyncpa %s513, 1

</llo_original>
